<compile_context>
chip_gen: v7x
topology: tpu7x:2x2x1
jax: 0.10.0
libtpu: 0.0.40
codegen_flags: <defaults>
</compile_context>

<pallas_src>
import functools

import jax
import jax.numpy as jnp
from jax.experimental import pallas as pl
from jax.experimental.pallas import tpu as pltpu


def _cdiv(a, b):
    return (a + b - 1) // b


def _dice_sums_kernel(logits_ref, labels_ref, inter_ref, card_ref, *,
                      tile, spg, hw_valid, needs_mask):
    """One (batch, group, hw-step) grid step.

    logits_ref: (C, T) logits, classes on sublanes / pixels on lanes
    labels_ref: (1, T) int32 labels (lane-dense row)
    inter_ref / card_ref: (C, 1) per-(batch, group) per-class sums; these output
        blocks stay VMEM-resident across the reduction axis and act as the
        accumulators (standard init/accumulate/writeback pattern).
    """
    g = pl.program_id(1)
    s = pl.program_id(2)

    @pl.when(s == 0)
    def _():
        inter_ref[...] = jnp.zeros_like(inter_ref)
        card_ref[...] = jnp.zeros_like(card_ref)

    logits = logits_ref[...].astype(jnp.float32)     # (C, T), upcast in-register
    labels = labels_ref[...]                         # (1, T) int32

    # numerically stable softmax over the class axis (sublanes, axis 0)
    m = jnp.max(logits, axis=0, keepdims=True)
    e = jnp.exp(logits - m)
    denom = jnp.sum(e, axis=0, keepdims=True)
    probas = e * pl.reciprocal(denom, approx=False)  # exact: keep 1e-5 tolerance

    c, t = logits.shape
    class_ids = jax.lax.broadcasted_iota(jnp.int32, (c, t), 0)
    onehot = (class_ids == labels).astype(jnp.float32)

    if needs_mask:
        # Ragged last block (and/or group-padded steps): OOB lanes may hold
        # arbitrary data.  Mask BOTH probas and onehot before accumulation so
        # garbage (even NaN from softmax of junk) contributes exactly zero.
        lane = jax.lax.broadcasted_iota(jnp.int32, (1, t), 1)
        pos = (g * spg + s) * tile + lane
        valid = pos < hw_valid
        probas = jnp.where(valid, probas, 0.0)
        onehot = jnp.where(valid, onehot, 0.0)

    # Per-step lane reduction (cross-lane part lands on the otherwise-idle XLU)
    # accumulated into the tiny resident (C, 1) output blocks.
    inter_ref[...] += jnp.sum(probas * onehot, axis=1, keepdims=True)
    card_ref[...] += jnp.sum(probas + onehot, axis=1, keepdims=True)


def dice_loss_pallas(pred, target, eps=1e-07, tile_hw=32768,
                     vmem_budget_bytes=16 * 1024 * 1024):
    """pred: [B, C, H, W] float logits (f32 or bf16); target: [B, 1, H, W] ints."""
    B, C, H, W = pred.shape
    assert target.shape == (B, 1, H, W)
    HW = H * W

    # Native-NCHW views: reshape only (no transpose pass), no dtype cast of the
    # big logits tensor in HBM — bf16 inputs stream at half the bytes.
    logits = pred.reshape(B, C, HW)
    labels = target.reshape(B, 1, HW).astype(jnp.int32)
    # TODO(synk): int8 labels would cut label HBM traffic 4x (C <= 127); kept
    # int32 for lowering safety of the (1, T) sub-32-bit load.

    # --- tile selection: large lane tiles, VMEM-budgeted, multiple of 128 ---
    tile_hw = max(128, (int(tile_hw) // 128) * 128)
    # double-buffered inputs only (outputs/accumulators are (C,1) and tiny)
    in_bytes_per_lane = 2 * (C * pred.dtype.itemsize + labels.dtype.itemsize)
    vmem_tile_cap = max(128, (vmem_budget_bytes // in_bytes_per_lane) // 128 * 128)
    tile = min(tile_hw, vmem_tile_cap)
    if HW <= tile:
        tile = HW          # single step; block == full array dim (always legal)
        steps = 1
    else:
        steps = _cdiv(HW, tile)   # ragged last block allowed; masked in-kernel

    # Guarantee >= 2 parallel units of work for v7x's two TensorCores even at
    # B == 1 by splitting the pixel-step range into 2 "parallel" groups.
    groups = 1 if (B >= 2 or steps < 2) else 2
    spg = _cdiv(steps, groups)
    needs_mask = (groups * spg * tile) != HW

    kernel = functools.partial(_dice_sums_kernel, tile=tile, spg=spg,
                               hw_valid=HW, needs_mask=needs_mask)

    def in_idx(b, g, s):
        # Clamp group-padded steps to the last valid block (their contribution
        # is zeroed by the in-kernel mask); keeps every DMA in bounds.
        return (b, 0, jnp.minimum(g * spg + s, steps - 1))

    out_idx = lambda b, g, s: (b, g, 0, 0)

    cost = pl.CostEstimate(
        flops=int(10 * B * C * HW),
        transcendentals=int(B * C * HW),
        bytes_accessed=int(logits.size * logits.dtype.itemsize
                           + labels.size * labels.dtype.itemsize
                           + 2 * B * groups * C * 4),
    )

    inter, card = pl.pallas_call(
        kernel,
        out_shape=(
            jax.ShapeDtypeStruct((B, groups, C, 1), jnp.float32),
            jax.ShapeDtypeStruct((B, groups, C, 1), jnp.float32),
        ),
        grid_spec=pltpu.PrefetchScalarGridSpec(
            num_scalar_prefetch=0,
            grid=(B, groups, spg),
            in_specs=[
                pl.BlockSpec((None, C, tile), in_idx),
                pl.BlockSpec((None, 1, tile), in_idx),
            ],
            out_specs=[
                pl.BlockSpec((None, None, C, 1), out_idx),
                pl.BlockSpec((None, None, C, 1), out_idx),
            ],
        ),
        compiler_params=pltpu.CompilerParams(
            dimension_semantics=("parallel", "parallel", "arbitrary"),
            vmem_limit_bytes=32 * 1024 * 1024,   # explicit: v5e scoped default is 16 MiB
        ),
        cost_estimate=cost,
    )(logits, labels)

    # Tiny glue: sum per-(batch, group) partials, combine per-class (C elements).
    inter = jnp.sum(inter[..., 0], axis=(0, 1))   # (C,)
    card = jnp.sum(card[..., 0], axis=(0, 1))     # (C,)
    dice = jnp.mean(2.0 * inter / (card + eps))
    return 1.0 - dice


def dice_loss_reference(pred, target, eps=1e-07):
    """Pure-JAX reference mirroring the PyTorch module."""
    B, C, H, W = pred.shape
    probas = jax.nn.softmax(pred.astype(jnp.float32), axis=1)
    onehot = jax.nn.one_hot(target[:, 0], C, dtype=jnp.float32)   # [B,H,W,C]
    onehot = jnp.transpose(onehot, (0, 3, 1, 2))                  # [B,C,H,W]
    inter = jnp.sum(probas * onehot, axis=(0, 2, 3))
    card = jnp.sum(probas + onehot, axis=(0, 2, 3))
    return 1.0 - jnp.mean(2.0 * inter / (card + eps))


if __name__ == "__main__":
    n_classes = 5
    key = jax.random.PRNGKey(0)
    k_pred, k_tgt = jax.random.split(key)

    def check(B, H, W, **kw):
        p = jax.random.normal(k_pred, (B, n_classes, H, W), dtype=jnp.float32)
        t = jax.random.randint(k_tgt, (B, 1, H, W), 0, n_classes, dtype=jnp.int32)
        got = jax.block_until_ready(dice_loss_pallas(p, t, **kw))
        ref = jax.block_until_ready(dice_loss_reference(p, t))
        assert jnp.allclose(got, ref, rtol=1e-5, atol=1e-5), (B, H, W, kw, got, ref)

    # main small shape (B=2, C=5, 16x16): single fat step per batch
    check(2, 16, 16)
    # non-multiple-of-128 spatial, single-step full-dim block path
    check(2, 10, 10)
    # multi-step path with an exact tiling (forced small tile)
    check(2, 16, 16, tile_hw=128)
    # ragged last block + in-kernel validity mask
    check(2, 13, 13, tile_hw=128)
    # B == 1: 2-way parallel group split with group-padded (clamped) steps
    check(1, 15, 20, tile_hw=128)

    print("KERNEL_OK")
</pallas_src>

<mosaic_0001>
module attributes {stable_mosaic.version = 11 : i64} {
  func.func @_dice_sums_kernel(%arg0: i32, %arg1: i32, %arg2: i32, %arg3: memref<1x5x256xf32, #tpu.memory_space<vmem>>, %arg4: memref<1x1x256xi32, #tpu.memory_space<vmem>>, %arg5: memref<1x1x5x1xf32, #tpu.memory_space<vmem>>, %arg6: memref<1x1x5x1xf32, #tpu.memory_space<vmem>>) attributes {dimension_semantics = [#tpu.dimension_semantics<parallel>, #tpu.dimension_semantics<parallel>, #tpu.dimension_semantics<arbitrary>], iteration_bounds = array<i64: 2, 1, 1>, scalar_prefetch = 0 : i64, scratch_operands = 0 : i64, tpu.core_type = #tpu.core_type<tc>, window_params = [{transform_indices = @transform_0, window_bounds = array<i64: 1, 5, 256>}, {transform_indices = @transform_1, window_bounds = array<i64: 1, 1, 256>}, {transform_indices = @transform_2, window_bounds = array<i64: 1, 1, 5, 1>}, {transform_indices = @transform_3, window_bounds = array<i64: 1, 1, 5, 1>}]} {
    %c0_i32 = arith.constant 0 : i32
    %0 = arith.cmpi eq, %arg2, %c0_i32 : i32
    %1 = arith.extui %0 : i1 to i32
    %c0_i32_0 = arith.constant 0 : i32
    %2 = arith.cmpi ne, %1, %c0_i32_0 : i32
    scf.if %2 {
      %cst_25 = arith.constant 0.000000e+00 : f32
      %40 = vector.broadcast %cst_25 : f32 to vector<5x1xf32>
      %c0_26 = arith.constant 0 : index
      %c0_27 = arith.constant 0 : index
      %c0_28 = arith.constant 0 : index
      %c0_29 = arith.constant 0 : index
      %41 = vector.load %arg5[%c0_26, %c0_27, %c0_28, %c0_29] : memref<1x1x5x1xf32, #tpu.memory_space<vmem>>, vector<1x1x5x1xf32>
      %42 = vector.shape_cast %41 : vector<1x1x5x1xf32> to vector<5x1xf32>
      %43 = vector.shape_cast %40 : vector<5x1xf32> to vector<1x1x5x1xf32>
      tpu.vector_store %arg5[%c0_26, %c0_27, %c0_28, %c0_29], %43 {strides = array<i32>} : memref<1x1x5x1xf32, #tpu.memory_space<vmem>>, vector<1x1x5x1xf32>,
      %cst_30 = arith.constant 0.000000e+00 : f32
      %44 = vector.broadcast %cst_30 : f32 to vector<5x1xf32>
      %c0_31 = arith.constant 0 : index
      %c0_32 = arith.constant 0 : index
      %c0_33 = arith.constant 0 : index
      %c0_34 = arith.constant 0 : index
      %45 = vector.load %arg6[%c0_31, %c0_32, %c0_33, %c0_34] : memref<1x1x5x1xf32, #tpu.memory_space<vmem>>, vector<1x1x5x1xf32>
      %46 = vector.shape_cast %45 : vector<1x1x5x1xf32> to vector<5x1xf32>
      %47 = vector.shape_cast %44 : vector<5x1xf32> to vector<1x1x5x1xf32>
      tpu.vector_store %arg6[%c0_31, %c0_32, %c0_33, %c0_34], %47 {strides = array<i32>} : memref<1x1x5x1xf32, #tpu.memory_space<vmem>>, vector<1x1x5x1xf32>,
    } else {
    }
    %c0 = arith.constant 0 : index
    %c0_1 = arith.constant 0 : index
    %c0_2 = arith.constant 0 : index
    %3 = vector.load %arg3[%c0, %c0_1, %c0_2] : memref<1x5x256xf32, #tpu.memory_space<vmem>>, vector<1x5x256xf32>
    %4 = vector.shape_cast %3 : vector<1x5x256xf32> to vector<5x256xf32>
    %c0_3 = arith.constant 0 : index
    %c0_4 = arith.constant 0 : index
    %c0_5 = arith.constant 0 : index
    %5 = vector.load %arg4[%c0_3, %c0_4, %c0_5] : memref<1x1x256xi32, #tpu.memory_space<vmem>>, vector<1x1x256xi32>
    %6 = vector.shape_cast %5 : vector<1x1x256xi32> to vector<1x256xi32>
    %cst = arith.constant dense<0xFF800000> : vector<256xf32>
    %7 = vector.multi_reduction <maximumf>, %4, %cst [0] : vector<5x256xf32> to vector<256xf32>
    %8 = vector.shape_cast %7 : vector<256xf32> to vector<1x256xf32>
    %9 = vector.broadcast %8 : vector<1x256xf32> to vector<5x256xf32>
    %10 = arith.subf %4, %9 : vector<5x256xf32>
    %11 = math.exp %10 : vector<5x256xf32>
    %cst_6 = arith.constant dense<0.000000e+00> : vector<256xf32>
    %12 = vector.multi_reduction <add>, %11, %cst_6 [0] : vector<5x256xf32> to vector<256xf32>
    %13 = vector.shape_cast %12 : vector<256xf32> to vector<1x256xf32>
    %14 = tpu.reciprocal %13 : vector<1x256xf32> -> vector<1x256xf32>
    %15 = vector.broadcast %14 : vector<1x256xf32> to vector<5x256xf32>
    %16 = arith.mulf %11, %15 : vector<5x256xf32>
    %17 = tpu.iota {dimensions = array<i32: 0>} : vector<5x256xi32>
    %18 = vector.broadcast %6 : vector<1x256xi32> to vector<5x256xi32>
    %19 = arith.cmpi eq, %17, %18 : vector<5x256xi32>
    %20 = arith.extui %19 : vector<5x256xi1> to vector<5x256xi32>
    %21 = arith.sitofp %20 : vector<5x256xi32> to vector<5x256xf32>
    %c0_7 = arith.constant 0 : index
    %c0_8 = arith.constant 0 : index
    %c0_9 = arith.constant 0 : index
    %c0_10 = arith.constant 0 : index
    %22 = vector.load %arg5[%c0_7, %c0_8, %c0_9, %c0_10] : memref<1x1x5x1xf32, #tpu.memory_space<vmem>>, vector<1x1x5x1xf32>
    %23 = vector.shape_cast %22 : vector<1x1x5x1xf32> to vector<5x1xf32>
    %24 = arith.mulf %16, %21 : vector<5x256xf32>
    %cst_11 = arith.constant dense<0.000000e+00> : vector<5xf32>
    %25 = vector.multi_reduction <add>, %24, %cst_11 [1] : vector<5x256xf32> to vector<5xf32>
    %26 = vector.shape_cast %25 : vector<5xf32> to vector<5x1xf32>
    %27 = arith.addf %23, %26 : vector<5x1xf32>
    %c0_12 = arith.constant 0 : index
    %c0_13 = arith.constant 0 : index
    %c0_14 = arith.constant 0 : index
    %c0_15 = arith.constant 0 : index
    %28 = vector.load %arg5[%c0_12, %c0_13, %c0_14, %c0_15] : memref<1x1x5x1xf32, #tpu.memory_space<vmem>>, vector<1x1x5x1xf32>
    %29 = vector.shape_cast %28 : vector<1x1x5x1xf32> to vector<5x1xf32>
    %30 = vector.shape_cast %27 : vector<5x1xf32> to vector<1x1x5x1xf32>
    tpu.vector_store %arg5[%c0_12, %c0_13, %c0_14, %c0_15], %30 {strides = array<i32>} : memref<1x1x5x1xf32, #tpu.memory_space<vmem>>, vector<1x1x5x1xf32>,
    %c0_16 = arith.constant 0 : index
    %c0_17 = arith.constant 0 : index
    %c0_18 = arith.constant 0 : index
    %c0_19 = arith.constant 0 : index
    %31 = vector.load %arg6[%c0_16, %c0_17, %c0_18, %c0_19] : memref<1x1x5x1xf32, #tpu.memory_space<vmem>>, vector<1x1x5x1xf32>
    %32 = vector.shape_cast %31 : vector<1x1x5x1xf32> to vector<5x1xf32>
    %33 = arith.addf %16, %21 : vector<5x256xf32>
    %cst_20 = arith.constant dense<0.000000e+00> : vector<5xf32>
    %34 = vector.multi_reduction <add>, %33, %cst_20 [1] : vector<5x256xf32> to vector<5xf32>
    %35 = vector.shape_cast %34 : vector<5xf32> to vector<5x1xf32>
    %36 = arith.addf %32, %35 : vector<5x1xf32>
    %c0_21 = arith.constant 0 : index
    %c0_22 = arith.constant 0 : index
    %c0_23 = arith.constant 0 : index
    %c0_24 = arith.constant 0 : index
    %37 = vector.load %arg6[%c0_21, %c0_22, %c0_23, %c0_24] : memref<1x1x5x1xf32, #tpu.memory_space<vmem>>, vector<1x1x5x1xf32>
    %38 = vector.shape_cast %37 : vector<1x1x5x1xf32> to vector<5x1xf32>
    %39 = vector.shape_cast %36 : vector<5x1xf32> to vector<1x1x5x1xf32>
    tpu.vector_store %arg6[%c0_21, %c0_22, %c0_23, %c0_24], %39 {strides = array<i32>} : memref<1x1x5x1xf32, #tpu.memory_space<vmem>>, vector<1x1x5x1xf32>,
    return
  }
  func.func @transform_0(%arg0: i32, %arg1: i32, %arg2: i32) -> (i32, i32, i32) {
    %c1_i32 = arith.constant 1 : i32
    %0 = arith.muli %arg1, %c1_i32 : i32
    %1 = arith.addi %0, %arg2 : i32
    %c0_i32 = arith.constant 0 : i32
    %2 = arith.minsi %1, %c0_i32 : i32
    %c0_i32_0 = arith.constant 0 : i32
    %c0_i32_1 = arith.constant 0 : i32
    return %arg0, %c0_i32_0, %2 : i32, i32, i32
  }
  func.func @transform_1(%arg0: i32, %arg1: i32, %arg2: i32) -> (i32, i32, i32) {
    %c1_i32 = arith.constant 1 : i32
    %0 = arith.muli %arg1, %c1_i32 : i32
    %1 = arith.addi %0, %arg2 : i32
    %c0_i32 = arith.constant 0 : i32
    %2 = arith.minsi %1, %c0_i32 : i32
    %c0_i32_0 = arith.constant 0 : i32
    %c0_i32_1 = arith.constant 0 : i32
    return %arg0, %c0_i32_0, %2 : i32, i32, i32
  }
  func.func @transform_2(%arg0: i32, %arg1: i32, %arg2: i32) -> (i32, i32, i32, i32) {
    %c0_i32 = arith.constant 0 : i32
    %c0_i32_0 = arith.constant 0 : i32
    %c0_i32_1 = arith.constant 0 : i32
    return %arg0, %arg1, %c0_i32, %c0_i32_0 : i32, i32, i32, i32
  }
  func.func @transform_3(%arg0: i32, %arg1: i32, %arg2: i32) -> (i32, i32, i32, i32) {
    %c0_i32 = arith.constant 0 : i32
    %c0_i32_0 = arith.constant 0 : i32
    %c0_i32_1 = arith.constant 0 : i32
    return %arg0, %arg1, %c0_i32, %c0_i32_0 : i32, i32, i32, i32
  }
}

</mosaic_0001>

<llo_original>
// kernel: tpu_custom_call.1
$region0: #{tpu_custom_call.1}
  #allocation0 [shape = 'u32[]', space=smem, size = 0x4, offset = 0x4, fixed_abs, tag = 'smem constant byte address 0x4 - core index']
  #allocation1 [shape = 'u32[144,128]{1,0:T(1,128)}', space=vmem, size = 0x12000, scoped, tag = 'internal scratch']
  %s0 = inlined_call_operand.vmem [shape: f32[2,5,256], index: 0, kind: input, shape index: {}]
  %s1 = inlined_call_operand.vmem [shape: s32[2,1,256], index: 1, kind: input, shape index: {}]
  %s2 = inlined_call_operand.vmem [shape: f32[2,1,5,1], index: 2, kind: output, shape index: {0}]
  %s3 = inlined_call_operand.vmem [shape: f32[2,1,5,1], index: 3, kind: output, shape index: {1}]
  %4 = xla_tuple %s2, %s3
  %s5 = sld [smem:[#allocation0]]
  $region53: #{tpu_custom_call.1} parent=0
    _
  %s7 = ssub.s32 1, %s5
  %s8 = scalar_select 0, %s7, %s5
  loop: start=0, step=1, limit=4
  $region2: #{tpu_custom_call.1} parent=0 // loop_pre_header
    _
  $region3: #{tpu_custom_call.1} parent=0 // loop_header
    %s10 = sphi 0, %s14
    %p11 = scmp.ge.s32.totalorder %s10, 4
    %s17 = sphi 0, %s36
    %s18 = sphi 0, %s32
    %s19 = sphi 0, %s28
    %s20 = sphi 0, %s17
    %s21 = sphi 0, %s18
    %s22 = sphi 0, %s19
    %s23 = sphi 0, %s20
    %s24 = sphi 0, %s21
    %s25 = sphi 0, %s22
    %s47 = sphi 0, %s49
    %s50 = sphi 0, %s47
    %s51 = sphi 0, %s50
    %s67 = sphi 0, %s51
    %s81 = sphi 0, %s83
    %s84 = sphi 0, %s81
    %s85 = sphi 0, %s84
    %s101 = sphi 0, %s85
    %s109 = sphi 0, %s111
    %s112 = sphi 0, %s109
    %s113 = sphi 0, %s112
    %s129 = sphi 0, %s113
    %s137 = sphi 0, %s139
    %s140 = sphi 0, %s137
    %s141 = sphi 0, %s140
    %s157 = sphi 0, %s141
  $region4: #{tpu_custom_call.1} parent=0 // loop_header_branch
    %13 = sbr.rel (%p11) target = $region8
  $region5: #{tpu_custom_call.1} parent=0 // loop_body
    %s15 = ssub.s32 %s10, 1
    %s16 = ssub.s32 %s10, 2
    %s26 = sadd.s32 1, %s19
    %p27 = scmp.ge.s32.totalorder %s26, 1
    %s28 = scalar_select %p27, 0, %s26
    %s29 = sadd.s32 1, %s18
    %s30 = scalar_select %p27, %s29, %s18
    %p31 = scmp.ge.s32.totalorder %s30, 1
    %s32 = scalar_select %p31, 0, %s30
    %s33 = sadd.s32 1, %s17
    %s34 = scalar_select %p31, %s33, %s17
    %p35 = scmp.ge.s32.totalorder %s34, 2
    %s36 = scalar_select %p35, 0, %s34
    %s37 = sadd.s32 %s18, %s19
    %p38 = scmp.lt.s32.totalorder %s37, 0
    %s39 = scalar_select %p38, %s37, 0
    %s40 = sadd.s32 %s32, %s28
    %p41 = scmp.lt.s32.totalorder %s40, 0
    %s42 = scalar_select %p41, %s40, 0
    %s43 = ssub.s32 %s17, %s36
    %s44 = ssub.s32 %s39, %s42
    %s45 = sor.u32 %s43, %s44
    %p46 = scmp.eq.s32.totalorder %s45, 0
    %s48 = sadd.s32 %s47, 1
    %s49 = scalar_select %p46, %s47, %s48
    %p52 = pneg %p46
    %p53 = scmp.eq.s32.totalorder %s10, 1
    %p54 = por %p52, %p53
    %p55 = scmp.ne.s32.totalorder %s47, %s50
    %p56 = scmp.eq.s32.totalorder %s10, 0
    %p57 = por %p55, %p56
    %p58 = scmp.ne.s32.totalorder %s47, %s50
    %p59 = scmp.eq.s32.totalorder %s15, 1
    %p60 = por %p58, %p59
    %p61 = scmp.ne.s32.totalorder %s50, %s51
    %p62 = scmp.eq.s32.totalorder %s15, 0
    %p63 = por %p61, %p62
    %p64 = scmp.ne.s32.totalorder %s50, %s51
    %p65 = scmp.eq.s32.totalorder %s16, 1
    %p66 = por %p64, %p65
    %p68 = scmp.ne.s32.totalorder %s51, %s67
    %p69 = scmp.eq.s32.totalorder %s16, 0
    %p70 = por %p68, %p69
    %s71 = sadd.s32 %s18, %s19
    %p72 = scmp.lt.s32.totalorder %s71, 0
    %s73 = scalar_select %p72, %s71, 0
    %s74 = sadd.s32 %s32, %s28
    %p75 = scmp.lt.s32.totalorder %s74, 0
    %s76 = scalar_select %p75, %s74, 0
    %s77 = ssub.s32 %s17, %s36
    %s78 = ssub.s32 %s73, %s76
    %s79 = sor.u32 %s77, %s78
    %p80 = scmp.eq.s32.totalorder %s79, 0
    %s82 = sadd.s32 %s81, 1
    %s83 = scalar_select %p80, %s81, %s82
    %p86 = pneg %p80
    %p87 = scmp.eq.s32.totalorder %s10, 1
    %p88 = por %p86, %p87
    %p89 = scmp.ne.s32.totalorder %s81, %s84
    %p90 = scmp.eq.s32.totalorder %s10, 0
    %p91 = por %p89, %p90
    %p92 = scmp.ne.s32.totalorder %s81, %s84
    %p93 = scmp.eq.s32.totalorder %s15, 1
    %p94 = por %p92, %p93
    %p95 = scmp.ne.s32.totalorder %s84, %s85
    %p96 = scmp.eq.s32.totalorder %s15, 0
    %p97 = por %p95, %p96
    %p98 = scmp.ne.s32.totalorder %s84, %s85
    %p99 = scmp.eq.s32.totalorder %s16, 1
    %p100 = por %p98, %p99
    %p102 = scmp.ne.s32.totalorder %s85, %s101
    %p103 = scmp.eq.s32.totalorder %s16, 0
    %p104 = por %p102, %p103
    %s105 = ssub.s32 %s17, %s36
    %s106 = ssub.s32 %s18, %s32
    %s107 = sor.u32 %s105, %s106
    %p108 = scmp.eq.s32.totalorder %s107, 0
    %s110 = sadd.s32 %s109, 1
    %s111 = scalar_select %p108, %s109, %s110
    %p114 = pneg %p108
    %p115 = scmp.eq.s32.totalorder %s10, 1
    %p116 = por %p114, %p115
    %p117 = scmp.ne.s32.totalorder %s109, %s112
    %p118 = scmp.eq.s32.totalorder %s10, 0
    %p119 = por %p117, %p118
    %p120 = scmp.ne.s32.totalorder %s109, %s112
    %p121 = scmp.eq.s32.totalorder %s15, 1
    %p122 = por %p120, %p121
    %p123 = scmp.ne.s32.totalorder %s112, %s113
    %p124 = scmp.eq.s32.totalorder %s15, 0
    %p125 = por %p123, %p124
    %p126 = scmp.ne.s32.totalorder %s112, %s113
    %p127 = scmp.eq.s32.totalorder %s16, 1
    %p128 = por %p126, %p127
    %p130 = scmp.ne.s32.totalorder %s113, %s129
    %p131 = scmp.eq.s32.totalorder %s16, 0
    %p132 = por %p130, %p131
    %s133 = ssub.s32 %s17, %s36
    %s134 = ssub.s32 %s18, %s32
    %s135 = sor.u32 %s133, %s134
    %p136 = scmp.eq.s32.totalorder %s135, 0
    %s138 = sadd.s32 %s137, 1
    %s139 = scalar_select %p136, %s137, %s138
    %p142 = pneg %p136
    %p143 = scmp.eq.s32.totalorder %s10, 1
    %p144 = por %p142, %p143
    %p145 = scmp.ne.s32.totalorder %s137, %s140
    %p146 = scmp.eq.s32.totalorder %s10, 0
    %p147 = por %p145, %p146
    %p148 = scmp.ne.s32.totalorder %s137, %s140
    %p149 = scmp.eq.s32.totalorder %s15, 1
    %p150 = por %p148, %p149
    %p151 = scmp.ne.s32.totalorder %s140, %s141
    %p152 = scmp.eq.s32.totalorder %s15, 0
    %p153 = por %p151, %p152
    %p154 = scmp.ne.s32.totalorder %s140, %s141
    %p155 = scmp.eq.s32.totalorder %s16, 1
    %p156 = por %p154, %p155
    %p158 = scmp.ne.s32.totalorder %s141, %s157
    %p159 = scmp.eq.s32.totalorder %s16, 0
    %p160 = por %p158, %p159
    %p161 = scmp.le.s32.totalorder 1, %s10
    %p162 = scmp.lt.s32.totalorder %s10, 3
    %p163 = pnand %p161, %p162
    %p164 = pneg %p163
    // Predicated region
    $region9: #{tpu_custom_call.1} parent=5 // pred_check
      _
    $region10: #{tpu_custom_call.1} parent=5 // pred_check_branch
      %166 = sbr.rel (%p163) target = $region12
    $region11: #{tpu_custom_call.1} parent=5 // pred_region
      %s167 = ssub.s32 %s10, 1
    $region12: #{tpu_custom_call.1} parent=5 // pred_fallthru
      _
    %p168 = scmp.lt.s32.totalorder %s10, 2
    // Predicated region
    $region13: #{tpu_custom_call.1} parent=5 // pred_check
      %p169 = pneg %p168
    $region14: #{tpu_custom_call.1} parent=5 // pred_check_branch
      %171 = sbr.rel (%p169) target = $region16
    $region15: #{tpu_custom_call.1} parent=5 // pred_region
      // Predicated region
      $region17: #{tpu_custom_call.1} parent=15 // pred_check
        %p172 = pneg %p57
      $region18: #{tpu_custom_call.1} parent=15 // pred_check_branch
        %174 = sbr.rel (%p172) target = $region20
      $region19: #{tpu_custom_call.1} parent=15 // pred_region
        %s175 = sadd.s32 %s18, %s19
        %p176 = scmp.lt.s32.totalorder %s175, 0
        %s177 = scalar_select %p176, %s175, 0
        %s178 = smul.u32 2, %s177
        %p179 = scmp.lt.s32.totalorder %s17, 1
        %s180 = scalar_select %p179, %s17, 1
        %p181 = scmp.lt.s32.totalorder %s178, 1
        %s182 = scalar_select %p181, %s178, 1
        %s183 = smul.addr %s180, 2
        %s184 = sadd.s32 %s182, %s183
        %s185 = smul.addr %s184, 8
        %s186 = scalar_lea.vmem %s0, %s185
        %s187 = sadd.s32 %s18, %s19
        %p188 = scmp.lt.s32.totalorder %s187, 0
        %s189 = scalar_select %p188, %s187, 0
        %s190 = smul.u32 2, %s189
      $region20: #{tpu_custom_call.1} parent=15 // pred_fallthru
        _
      // Predicated region
      $region21: #{tpu_custom_call.1} parent=15 // pred_check
        %p191 = pneg %p91
      $region22: #{tpu_custom_call.1} parent=15 // pred_check_branch
        %193 = sbr.rel (%p191) target = $region24
      $region23: #{tpu_custom_call.1} parent=15 // pred_region
        %s194 = sadd.s32 %s18, %s19
        %p195 = scmp.lt.s32.totalorder %s194, 0
        %s196 = scalar_select %p195, %s194, 0
        %s197 = smul.u32 2, %s196
        %p198 = scmp.lt.s32.totalorder %s17, 1
        %s199 = scalar_select %p198, %s17, 1
        %p200 = scmp.lt.s32.totalorder %s197, 1
        %s201 = scalar_select %p200, %s197, 1
        %s202 = smul.addr %s199, 2
        %s203 = sadd.s32 %s201, %s202
        %s204 = scalar_lea.vmem %s1, %s203
        %s205 = sadd.s32 %s18, %s19
        %p206 = scmp.lt.s32.totalorder %s205, 0
        %s207 = scalar_select %p206, %s205, 0
        %s208 = smul.u32 2, %s207
      $region24: #{tpu_custom_call.1} parent=15 // pred_fallthru
        _
    $region16: #{tpu_custom_call.1} parent=5 // pred_fallthru
      _
    %p209 = scmp.le.s32.totalorder 1, %s10
    %p210 = scmp.lt.s32.totalorder %s10, 3
    %p211 = pnand %p209, %p210
    %p212 = pneg %p211
    // Predicated region
    $region25: #{tpu_custom_call.1} parent=5 // pred_check
      _
    $region26: #{tpu_custom_call.1} parent=5 // pred_check_branch
      %214 = sbr.rel (%p211) target = $region28
    $region27: #{tpu_custom_call.1} parent=5 // pred_region
      %s215 = ssub.s32 %s10, 1
      %s216 = sadd.s32 %s21, %s22
      %p217 = scmp.lt.s32.totalorder %s216, 0
      %s218 = scalar_select %p217, %s216, 0
      %s219 = smul.u32 2, %s218
      %p220 = scmp.lt.s32.totalorder %s20, 1
      %s221 = scalar_select %p220, %s20, 1
      %p222 = scmp.lt.s32.totalorder %s219, 1
      %s223 = scalar_select %p222, %s219, 1
      %s224 = smul.addr %s221, 2
      %s225 = sadd.s32 %s223, %s224
      %s226 = smul.addr %s225, 8
      %s227 = scalar_lea.vmem %s0, %s226
      %p228 = pneg %p63
      %p229 = pneg %p60
      %s230 = sadd.s32 %s21, %s22
      %p231 = scmp.lt.s32.totalorder %s230, 0
      %s232 = scalar_select %p231, %s230, 0
      %s233 = smul.u32 2, %s232
      %p234 = scmp.lt.s32.totalorder %s20, 1
      %s235 = scalar_select %p234, %s20, 1
      %p236 = scmp.lt.s32.totalorder %s233, 1
      %s237 = scalar_select %p236, %s233, 1
      %s238 = smul.addr %s235, 2
      %s239 = sadd.s32 %s237, %s238
      %s240 = scalar_lea.vmem %s1, %s239
      %p241 = pneg %p97
      %p242 = pneg %p94
      %p243 = pneg %p125
      %p244 = pneg %p122
      %p245 = scmp.lt.s32.totalorder %s20, 1
      %s246 = scalar_select %p245, %s20, 1
      %p247 = scmp.lt.s32.totalorder %s21, 0
      %s248 = scalar_select %p247, %s21, 0
      %s249 = sadd.s32 %s248, %s246
      %s250 = smul.addr %s249, 8
      %s251 = scalar_lea.vmem %s2, %s250
      %p252 = pneg %p153
      %p253 = pneg %p150
      %p254 = scmp.lt.s32.totalorder %s20, 1
      %s255 = scalar_select %p254, %s20, 1
      %p256 = scmp.lt.s32.totalorder %s21, 0
      %s257 = scalar_select %p256, %s21, 0
      %s258 = sadd.s32 %s257, %s255
      %s259 = smul.addr %s258, 8
      %s260 = scalar_lea.vmem %s3, %s259
      %s261 = sadd.s32 %s21, %s22
      %p262 = scmp.lt.s32.totalorder %s261, 0
      %s263 = scalar_select %p262, %s261, 0
      %s264 = smul.u32 2, %s263
      %p265 = scmp.lt.s32.totalorder %s20, 1
      %s266 = scalar_select %p265, %s20, 1
      %p267 = scmp.lt.s32.totalorder %s264, 1
      %s268 = scalar_select %p267, %s264, 1
      %s269 = smul.addr %s266, 2
      %s270 = sadd.s32 %s268, %s269
      %s271 = smul.addr %s270, 8
      %s272 = scalar_lea.vmem %s0, %s271
      %s273 = sadd.s32 %s21, %s22
      %p274 = scmp.lt.s32.totalorder %s273, 0
      %s275 = scalar_select %p274, %s273, 0
      %s276 = smul.u32 2, %s275
      %s277 = sadd.s32 %s21, %s22
      %p278 = scmp.lt.s32.totalorder %s277, 0
      %s279 = scalar_select %p278, %s277, 0
      %s280 = smul.u32 2, %s279
      %p281 = scmp.lt.s32.totalorder %s20, 1
      %s282 = scalar_select %p281, %s20, 1
      %p283 = scmp.lt.s32.totalorder %s280, 1
      %s284 = scalar_select %p283, %s280, 1
      %s285 = smul.addr %s282, 2
      %s286 = sadd.s32 %s284, %s285
      %s287 = scalar_lea.vmem %s1, %s286
      %s288 = sadd.s32 %s21, %s22
      %p289 = scmp.lt.s32.totalorder %s288, 0
      %s290 = scalar_select %p289, %s288, 0
      %s291 = smul.u32 2, %s290
      %p292 = scmp.lt.s32.totalorder %s20, 1
      %s293 = scalar_select %p292, %s20, 1
      %p294 = scmp.lt.s32.totalorder %s21, 0
      %s295 = scalar_select %p294, %s21, 0
      %s296 = sadd.s32 %s295, %s293
      %s297 = smul.addr %s296, 8
      %s298 = scalar_lea.vmem %s2, %s297
      %p299 = scmp.lt.s32.totalorder %s20, 1
      %s300 = scalar_select %p299, %s20, 1
      %p301 = scmp.lt.s32.totalorder %s21, 0
      %s302 = scalar_select %p301, %s21, 0
      %s303 = sadd.s32 %s302, %s300
      %s304 = smul.addr %s303, 8
      %s305 = scalar_lea.vmem %s3, %s304
      %p306 = scmp.eq.s32.totalorder %s22, 0
      // Predicated region
      $region29: #{tpu_custom_call.1} parent=27 // pred_check
        %p307 = pneg %p306
      $region30: #{tpu_custom_call.1} parent=27 // pred_check_branch
        %309 = sbr.rel (%p307) target = $region32
      $region31: #{tpu_custom_call.1} parent=27 // pred_region
        %vm310 = vcmask 4096
        %311 = vst.msk [vmem:[%s298] sm:$0x1f] %vm310, 0.0
        %312 = vst.msk [vmem:[%s305] sm:$0x1f] %vm310, 0.0
      $region32: #{tpu_custom_call.1} parent=27 // pred_fallthru
        _
      %v313 = vld [vmem:[%s272] sm:$0x1f]
      %v314 = vld [vmem:[%s272 + $0x8] sm:$0x1f]
      %v315 = vld [vmem:[%s287] sm:$0x3]
      %vm316 = vcmask 1044480
      %v317 = vsel %vm316, %v313, -inf
      %v318 = vrot.slane %v317, 4
      %v319 = vmax.f32 %v317, %v318
      %v320 = vrot.slane %v319, 2
      %v321 = vmax.f32 %v319, %v320
      %v322 = vrot.slane %v321, 1
      %v323 = vmax.f32 %v321, %v322
      %v324 = vsel %vm316, %v314, -inf
      %v325 = vrot.slane %v324, 4
      %v326 = vmax.f32 %v324, %v325
      %v327 = vrot.slane %v326, 2
      %v328 = vmax.f32 %v326, %v327
      %v329 = vrot.slane %v328, 1
      %v330 = vmax.f32 %v328, %v329
      %v331 = vsub.f32 %v313, %v323
      %v332 = vsub.f32 %v314, %v330
      %v333 = vmul.f32 %v331, 1.442695
      %v334 = vpow.pop %v333
      %v335 = vmul.f32 %v332, 1.442695
      %v336 = vpow.pop %v335
      %v337 = vsel %vm316, %v334, 0.0
      %v338 = vrot.slane %v337, 4
      %v339 = vadd.f32 %v337, %v338
      %v340 = vrot.slane %v339, 2
      %v341 = vadd.f32 %v339, %v340
      %v342 = vrot.slane %v341, 1
      %v343 = vadd.f32 %v341, %v342
      %v344 = vsel %vm316, %v336, 0.0
      %v345 = vrot.slane %v344, 4
      %v346 = vadd.f32 %v344, %v345
      %v347 = vrot.slane %v346, 2
      %v348 = vadd.f32 %v346, %v347
      %v349 = vrot.slane %v348, 1
      %v350 = vadd.f32 %v348, %v349
      %v351 = vrcp.pop %v343
      %v352 = vrcp.pop %v350
      %v353 = vmul.f32 %v334, %v351
      %v354 = vmul.f32 %v336, %v352
      %v355 = vlaneseq
      %v356 = vshrl.u32 %v355, 7
      %v357 = vlaneseq
      %v358 = vshrl.u32 %v357, 7
      %v359 = vsub.s32 0, %v358
      %v360 = vrot.slane %v315, %v359
      %v361 = vlaneseq
      %v362 = vshrl.u32 %v361, 7
      %v363 = vsub.s32 1, %v362
      %v364 = vrot.slane %v315, %v363
      %vm365 = vcmp.eq.s32.totalorder %v356, %v360
      %vm366 = vcmp.eq.s32.totalorder %v356, %v364
      %v367 = vsel %vm365, 1, 0
      %v368 = vsel %vm366, 1, 0
      %v369 = vcvt.s32.f32 %v367
      %v370 = vcvt.s32.f32 %v368
      %v371 = vld [vmem:[%s298] sm:$0x1f]
      %v372 = vmul.f32 %v353, %v369
      %v373 = vmul.f32 %v354, %v370
      %v374 = vsel %vm316, %v372, 0.0
      %v375 = vsel %vm316, %v373, 0.0
      %v376 = vadd.f32 %v374, %v375
      %377 = vadd.xlane.f32.xlu0 %v376
      %v378 = vpop.xlane.xlu0 %377
      %v379 = vadd.f32 %v371, %v378
      %vm380 = vcmask 4096
      %381 = vst.msk [vmem:[%s298] sm:$0x1f] %vm380, %v379
      %v382 = vld [vmem:[%s305] sm:$0x1f]
      %v383 = vadd.f32 %v353, %v369
      %v384 = vadd.f32 %v354, %v370
      %v385 = vsel %vm316, %v383, 0.0
      %v386 = vsel %vm316, %v384, 0.0
      %v387 = vadd.f32 %v385, %v386
      %388 = vadd.xlane.f32.xlu0 %v387
      %v389 = vpop.xlane.xlu0 %388
      %v390 = vadd.f32 %v382, %v389
      %391 = vst.msk [vmem:[%s305] sm:$0x1f] %vm380, %v390
      %p392 = scmp.lt.s32.totalorder %s20, 1
      %s393 = scalar_select %p392, %s20, 1
      %p394 = scmp.lt.s32.totalorder %s21, 0
      %s395 = scalar_select %p394, %s21, 0
      %s396 = sadd.s32 %s395, %s393
      %s397 = smul.addr %s396, 8
      %s398 = scalar_lea.vmem %s2, %s397
      %p399 = scmp.lt.s32.totalorder %s20, 1
      %s400 = scalar_select %p399, %s20, 1
      %p401 = scmp.lt.s32.totalorder %s21, 0
      %s402 = scalar_select %p401, %s21, 0
      %s403 = sadd.s32 %s402, %s400
      %s404 = smul.addr %s403, 8
      %s405 = scalar_lea.vmem %s3, %s404
      // Predicated region
      $region33: #{tpu_custom_call.1} parent=27 // pred_check
        %p406 = pneg %p122
      $region34: #{tpu_custom_call.1} parent=27 // pred_check_branch
        %408 = sbr.rel (%p406) target = $region36
      $region35: #{tpu_custom_call.1} parent=27 // pred_region
        _
      $region36: #{tpu_custom_call.1} parent=27 // pred_fallthru
        _
      // Predicated region
      $region37: #{tpu_custom_call.1} parent=27 // pred_check
        %p409 = pneg %p150
      $region38: #{tpu_custom_call.1} parent=27 // pred_check_branch
        %411 = sbr.rel (%p409) target = $region40
      $region39: #{tpu_custom_call.1} parent=27 // pred_region
        _
      $region40: #{tpu_custom_call.1} parent=27 // pred_fallthru
        _
    $region28: #{tpu_custom_call.1} parent=5 // pred_fallthru
      _
    %p412 = scmp.le.s32.totalorder 2, %s10
    // Predicated region
    $region41: #{tpu_custom_call.1} parent=5 // pred_check
      %p413 = pneg %p412
    $region42: #{tpu_custom_call.1} parent=5 // pred_check_branch
      %415 = sbr.rel (%p413) target = $region44
    $region43: #{tpu_custom_call.1} parent=5 // pred_region
      %s416 = ssub.s32 %s10, 2
      // Predicated region
      $region45: #{tpu_custom_call.1} parent=43 // pred_check
        %p417 = pneg %p128
      $region46: #{tpu_custom_call.1} parent=43 // pred_check_branch
        %419 = sbr.rel (%p417) target = $region48
      $region47: #{tpu_custom_call.1} parent=43 // pred_region
        %p420 = scmp.lt.s32.totalorder %s23, 1
        %s421 = scalar_select %p420, %s23, 1
        %p422 = scmp.lt.s32.totalorder %s24, 0
        %s423 = scalar_select %p422, %s24, 0
        %s424 = sadd.s32 %s423, %s421
        %s425 = smul.addr %s424, 8
        %s426 = scalar_lea.vmem %s2, %s425
      $region48: #{tpu_custom_call.1} parent=43 // pred_fallthru
        _
      // Predicated region
      $region49: #{tpu_custom_call.1} parent=43 // pred_check
        %p427 = pneg %p156
      $region50: #{tpu_custom_call.1} parent=43 // pred_check_branch
        %429 = sbr.rel (%p427) target = $region52
      $region51: #{tpu_custom_call.1} parent=43 // pred_region
        %p430 = scmp.lt.s32.totalorder %s23, 1
        %s431 = scalar_select %p430, %s23, 1
        %p432 = scmp.lt.s32.totalorder %s24, 0
        %s433 = scalar_select %p432, %s24, 0
        %s434 = sadd.s32 %s433, %s431
        %s435 = smul.addr %s434, 8
        %s436 = scalar_lea.vmem %s3, %s435
      $region52: #{tpu_custom_call.1} parent=43 // pred_fallthru
        _
    $region44: #{tpu_custom_call.1} parent=5 // pred_fallthru
      _
  $region6: #{tpu_custom_call.1} parent=0 // loop_footer
    %s14 = sadd.s32 1, %s10
  $region7: #{tpu_custom_call.1} parent=0 // loop_footer_branch
    %9 = sbr.rel target = $region3
  $region8: #{tpu_custom_call.1} parent=0 // loop_exit
    _

</llo_original>
